<compile_context>
chip_gen: v5e
topology: v5e:2x2
jax: 0.10.0
libtpu: 0.0.40
codegen_flags: <defaults>
</compile_context>

<pallas_src>
from functools import partial

import numpy as np
import jax
import jax.numpy as jnp
from jax import lax
from jax.experimental import pallas as pl
from jax.experimental.pallas import tpu as pltpu

# ----------------------------- configuration (small, deterministic) -----------------------------
BS = 2                       # images
CS = 4                       # meta-class branches (softmax is across these)
NA = 3                       # anchors per feature scale
NC = 1                       # per-branch class channels (the reference .view() requires nC == 1)
INPUT_SIZE = (64, 64)
FEATURE_SCALE = [32, 16, 8]
ANCHORS = [20., 24., 28., 18., 30., 34.,
           10., 14., 14., 10., 16., 18.,
            4.,  6.,  6.,  4.,  8.,  8.]

PAD_LOGIT = -20.0            # pad-lane fill: sigmoid(-20) ~ 2e-9 -> conf50 = 0, exp(-20)*0 = 0


# ============================== Pallas kernel 1: activation + decode ==============================
# out_ref : (5, nB, L_pad)  raw conv channels [tx, ty, tw, th, tconf_logit]
# c_ref   : (5, L_pad)      packed constants  [grid_x, grid_y, scale, anchor_w, anchor_h]
# act_ref : (5, nB, L_pad)  [x, y, w, h, conf]              (device-resident, feeds kernel 2)
# box_ref : (5, nB, L_pad)  [conf, px, py, pw, ph]          (single D2H payload for host glue)
def _decode_kernel(out_ref, c_ref, act_ref, box_ref):
    tx = out_ref[0]
    ty = out_ref[1]
    tw = out_ref[2]
    th = out_ref[3]
    tc = out_ref[4]

    # box-offset sigmoids: exp + approx reciprocal both ride the EUP slot (frees VALU bundles)
    x = pl.reciprocal(1.0 + jnp.exp(-tx), approx=True)
    y = pl.reciprocal(1.0 + jnp.exp(-ty), approx=True)
    # exact sigmoid for conf: it feeds log() in the BCE and the > 0.5 threshold
    conf = 1.0 / (1.0 + jnp.exp(-tc))

    gx = c_ref[0:1, :]
    gy = c_ref[1:2, :]
    sc = c_ref[2:3, :]
    aw = c_ref[3:4, :]
    ah = c_ref[4:5, :]

    act_ref[0] = x
    act_ref[1] = y
    act_ref[2] = tw
    act_ref[3] = th
    act_ref[4] = conf

    box_ref[0] = conf
    box_ref[1] = (x + gx) * sc
    box_ref[2] = (y + gy) * sc
    box_ref[3] = jnp.exp(tw) * aw
    box_ref[4] = jnp.exp(th) * ah


@partial(jax.jit, static_argnames=("nA", "nC", "bs", "cs", "L_pad"))
def decode_and_cls(output, consts, *, nA, nC, bs, cs, L_pad):
    """Returns (act slab (5,nB,L_pad), box slab (5,nB,L_pad), cls logits (cs, bs*L_pad))."""
    nB, _, N = output.shape
    L = nA * N
    C = 5 + nC
    out4 = output.reshape(nB, nA, C, N)
    # channel-major, lane-dense: (C, nB, nA*N)
    chan_major = jnp.transpose(out4, (2, 0, 1, 3)).reshape(C, nB, L)
    pad = L_pad - L
    act_in = jnp.pad(chan_major[:5], ((0, 0), (0, 0), (0, pad)),
                     constant_values=PAD_LOGIT)

    act_slab, box_slab = pl.pallas_call(
        _decode_kernel,
        grid=(1,),
        in_specs=[pl.BlockSpec((5, nB, L_pad), lambda i: (0, 0, 0)),
                  pl.BlockSpec((5, L_pad), lambda i: (0, 0))],
        out_specs=(pl.BlockSpec((5, nB, L_pad), lambda i: (0, 0, 0)),
                   pl.BlockSpec((5, nB, L_pad), lambda i: (0, 0, 0))),
        out_shape=(jax.ShapeDtypeStruct((5, nB, L_pad), jnp.float32),
                   jax.ShapeDtypeStruct((5, nB, L_pad), jnp.float32)),
        compiler_params=pltpu.CompilerParams(dimension_semantics=("arbitrary",)),
    )(act_in, consts)

    # classification logits, transposed so the softmax axis (cs) sits on the sublane axis
    # (requires nC == 1, same constraint the reference .view() imposes); padded per-image
    cls = out4[:, :, 5, :].reshape(bs, cs, L)
    cls = jnp.pad(cls, ((0, 0), (0, 0), (0, pad)))
    cls = jnp.transpose(cls, (1, 0, 2)).reshape(cs, bs * L_pad)
    return act_slab, box_slab, cls


# ==================== Pallas kernel 2 (fused): masked region losses + softmax CE + final loss ====================
# act_ref  : (5, nB, L_pad)  [x, y, w, h, conf]
# tgt_ref  : (7, nB, L_pad)  [tx, ty, tw, th, obj, noobj, iou]  (tconf == obj; pad lanes are 0)
# cls_ref  : (CS, M)         classification logits, softmax over sublane axis (M = bs*L_pad)
# aux_ref  : (2, M)          [cls_mask (0/1), class label (as float)]
# out_ref  : (1, 8) SMEM     [loss, n_obj, n_noobj, prec_num, conf50_sum, ce_sum, n_cls, acc_sum]
# term_ref : (10, nB, L_pad) VMEM scratch for the batched reduction
def _loss_cls_kernel(act_ref, tgt_ref, cls_ref, aux_ref, out_ref, term_ref, *,
                     coord_scale, obj_scale, noobj_scale, class_scale):
    x, y, w, h, conf = act_ref[0], act_ref[1], act_ref[2], act_ref[3], act_ref[4]
    tx, ty, tw, th = tgt_ref[0], tgt_ref[1], tgt_ref[2], tgt_ref[3]
    obj, noobj, iou = tgt_ref[4], tgt_ref[5], tgt_ref[6]

    # BCE with the same log clamp PyTorch's BCELoss uses (log clamped to -100); target = tconf = obj.
    logp = jnp.maximum(jnp.log(conf), -100.0)
    log1mp = jnp.maximum(jnp.log(1.0 - conf), -100.0)
    bce = -(obj * logp + (1.0 - obj) * log1mp)

    conf50 = (conf > 0.5).astype(jnp.float32)
    iou50 = (iou > 0.5).astype(jnp.float32)

    # ---- batched region reductions: stack the 10 masked term maps, one lane-axis reduce ----
    term_ref[0] = obj * (x - tx) ** 2
    term_ref[1] = obj * (y - ty) ** 2
    term_ref[2] = obj * (w - tw) ** 2
    term_ref[3] = obj * (h - th) ** 2
    term_ref[4] = obj
    term_ref[5] = obj * bce
    term_ref[6] = noobj * bce
    term_ref[7] = noobj
    term_ref[8] = iou50 * conf50 * obj          # precision numerator (tconf == obj)
    term_ref[9] = conf50

    part = jnp.sum(term_ref[...], axis=2, keepdims=True)       # (10, nB, 1) -- one batched reduce
    s = [jnp.sum(part[k]) for k in range(10)]                   # tiny (nB,1) folds

    # ---- softmax across meta-inputs (sublane axis) + masked cross-entropy ----
    cls = cls_ref[...]                                          # (C, M)
    Cc = cls.shape[0]
    m = jnp.max(cls, axis=0, keepdims=True)                     # (1, M)
    e = jnp.exp(cls - m)
    lse = jnp.log(jnp.sum(e, axis=0, keepdims=True)) + m        # logsumexp, (1, M)

    iota_f = lax.broadcasted_iota(jnp.int32, cls.shape, 0).astype(jnp.float32)
    # argmax of softmax == argmax of logits (first max on ties)
    ids_f = jnp.min(jnp.where(cls >= m, iota_f, float(Cc)), axis=0, keepdims=True)

    mask = aux_ref[0:1, :]                                      # (1, M) {0,1}; 0 in pad lanes
    labels = aux_ref[1:2, :]                                    # (1, M) class ids as float
    onehot = (iota_f == labels).astype(jnp.float32)             # (C, M)
    picked = jnp.sum(cls * onehot, axis=0, keepdims=True)
    ce = lse - picked                                           # per-cell cross entropy, (1, M)

    ce_sum = jnp.sum(mask * ce)
    n_cls = jnp.sum(mask)
    acc_sum = jnp.sum(mask * (ids_f == labels).astype(jnp.float32))

    # ---- assemble the FINAL scalar loss on-device (scales are static constants) ----
    n_obj, n_noobj = s[4], s[7]
    # eps guard: with zero GT boxes the numerators are 0, so the terms become 0 (no NaN);
    # with n_obj / n_noobj >= 1 the values are bit-identical to the plain divide.
    inv_obj = 1.0 / jnp.maximum(n_obj, 1e-16)
    inv_noobj = 1.0 / jnp.maximum(n_noobj, 1e-16)
    loss_x = coord_scale * s[0] * inv_obj
    loss_y = coord_scale * s[1] * inv_obj
    loss_w = coord_scale * s[2] * inv_obj
    loss_h = coord_scale * s[3] * inv_obj
    loss_conf = obj_scale * s[5] * inv_obj + noobj_scale * s[6] * inv_noobj
    loss_cls = class_scale * ce_sum / jnp.maximum(n_cls, 1e-16)
    loss = loss_x + loss_y + loss_w + loss_h + loss_conf + loss_cls

    out_ref[0, 0] = loss
    out_ref[0, 1] = n_obj
    out_ref[0, 2] = n_noobj
    out_ref[0, 3] = s[8]        # precision numerator
    out_ref[0, 4] = s[9]        # sum(conf50)
    out_ref[0, 5] = ce_sum
    out_ref[0, 6] = n_cls
    out_ref[0, 7] = acc_sum


@partial(jax.jit, static_argnames=("coord_scale", "obj_scale", "noobj_scale", "class_scale"))
def loss_cls_call(act_slab, tgt_slab, cls, cls_aux, *, coord_scale, obj_scale,
                  noobj_scale, class_scale):
    _, nB, Lp = act_slab.shape
    C, M = cls.shape
    kern = partial(_loss_cls_kernel, coord_scale=coord_scale, obj_scale=obj_scale,
                   noobj_scale=noobj_scale, class_scale=class_scale)
    return pl.pallas_call(
        kern,
        grid=(1,),
        in_specs=[pl.BlockSpec((5, nB, Lp), lambda i: (0, 0, 0)),
                  pl.BlockSpec((7, nB, Lp), lambda i: (0, 0, 0)),
                  pl.BlockSpec((C, M), lambda i: (0, 0)),
                  pl.BlockSpec((2, M), lambda i: (0, 0))],
        out_specs=pl.BlockSpec((1, 8), lambda i: (0, 0),
                               memory_space=pltpu.MemorySpace.SMEM),
        out_shape=jax.ShapeDtypeStruct((1, 8), jnp.float32),
        scratch_shapes=[pltpu.VMEM((10, nB, Lp), jnp.float32)],
        compiler_params=pltpu.CompilerParams(dimension_semantics=("arbitrary",)),
    )(act_slab, tgt_slab, cls, cls_aux)


# ============================== host glue: build_targets (data dependent) ==============================
def bbox_ious_np(boxes1, boxes2):
    # boxes given as (4, ...) rows cx, cy, w, h  (x1y1x2y2=False path of the reference)
    mx = np.minimum(boxes1[0] - boxes1[2] / 2.0, boxes2[0] - boxes2[2] / 2.0)
    Mx = np.maximum(boxes1[0] + boxes1[2] / 2.0, boxes2[0] + boxes2[2] / 2.0)
    my = np.minimum(boxes1[1] - boxes1[3] / 2.0, boxes2[1] - boxes2[3] / 2.0)
    My = np.maximum(boxes1[1] + boxes1[3] / 2.0, boxes2[1] + boxes2[3] / 2.0)
    w1, h1 = boxes1[2], boxes1[3]
    w2, h2 = boxes2[2], boxes2[3]
    uw, uh = Mx - mx, My - my
    cw, ch = w1 + w2 - uw, h1 + h2 - uh
    carea = np.where((cw <= 0) | (ch <= 0), 0.0, cw * ch)
    uarea = w1 * h1 + w2 * h2 - carea
    return carea / uarea


def build_targets_np(pred_boxes, target, conf, anchors, nA, feature_size, input_size, ignore_thresh):
    # TODO(synk): data-dependent scatter with dynamic #boxes; kept on host (no clean Pallas equivalent).
    nB = target.shape[0]
    fh, fw = int(feature_size[0]), int(feature_size[1])
    obj_mask = np.zeros((nB, nA, fh, fw), np.float32)
    noobj_mask = np.ones((nB, nA, fh, fw), np.float32)
    tx = np.zeros((nB, nA, fh, fw), np.float32)
    ty = np.zeros_like(tx); tw = np.zeros_like(tx); th = np.zeros_like(tx)
    tcls = np.zeros_like(tx); iou_scores = np.zeros_like(tx)

    tboxes = target.reshape(-1, 5)
    nonzero = tboxes[:, 3] > 0
    ind_B = np.repeat(np.arange(nB), target.shape[1] // 5)[nonzero]
    tboxes = tboxes[nonzero]
    nbox = tboxes.shape[0]

    gx = tboxes[:, 1] * fw
    gy = tboxes[:, 2] * fh
    gw = tboxes[:, 3] * input_size[1]
    gh = tboxes[:, 4] * input_size[0]
    aw, ah = anchors[:, 0], anchors[:, 1]

    gt_box = np.stack([np.zeros(nbox), np.zeros(nbox), gw, gh], 0)           # (4, nbox)
    anchor_box = np.stack([np.zeros(nA), np.zeros(nA), aw, ah], 0)           # (4, nA)
    ious = bbox_ious_np(gt_box[:, :, None], anchor_box[:, None, :])          # (nbox, nA)
    best_a = ious.argmax(1) if nbox else np.zeros(0, np.int64)

    gj = gy.astype(np.int64)
    gi = gx.astype(np.int64)
    obj_mask[ind_B, best_a, gj, gi] = 1
    noobj_mask[ind_B, best_a, gj, gi] = 0
    for i in range(nbox):
        ignore = ious[i] > ignore_thresh
        if ignore.any():
            noobj_mask[ind_B[i], np.nonzero(ignore)[0], gj[i], gi[i]] = 0

    tx[ind_B, best_a, gj, gi] = gx - np.floor(gx)
    ty[ind_B, best_a, gj, gi] = gy - np.floor(gy)
    tw[ind_B, best_a, gj, gi] = np.log(gw / anchors[best_a, 0]) if nbox else 0
    th[ind_B, best_a, gj, gi] = np.log(gh / anchors[best_a, 1]) if nbox else 0
    tcls[ind_B, best_a, gj, gi] = tboxes[:, 0]

    pred_boxes = pred_boxes.reshape(nB, nA, fh, fw, 4)
    conf = conf.reshape(nB, nA, fh, fw)
    target_boxes = np.stack([tboxes[:, 1] * input_size[1], tboxes[:, 2] * input_size[0], gw, gh], 0)
    if nbox:
        pb = pred_boxes[ind_B, best_a, gj, gi].T                             # (4, nbox)
        iou_scores[ind_B, best_a, gj, gi] = bbox_ious_np(pb, target_boxes)
    conf50 = (conf[ind_B, best_a, gj, gi] > 0.5).astype(np.float32)
    detected50 = (iou_scores[ind_B, best_a, gj, gi] > 0.5).astype(np.float32) * conf50
    detected75 = (iou_scores[ind_B, best_a, gj, gi] > 0.75).astype(np.float32) * conf50
    # tconf == obj_mask in the reference; only obj_mask is returned / shipped to the kernel.
    return (nbox, iou_scores, obj_mask, noobj_mask, tx, ty, tw, th, tcls, detected50, detected75)


# ============================== RegionLossV2 (JAX/Pallas) ==============================
class RegionLossV2:
    def __init__(self, num_classes=1, anchors=(), num_anchors=3, input_size=(64, 64)):
        self.num_classes = num_classes
        self.anchors = list(anchors)
        self.num_anchors = num_anchors
        self.coord_scale = 1.0
        self.class_scale = 1.0
        self.obj_scale = 1.0
        self.noobj_scale = 100.0
        self.thresh = 0.5
        self.seen = 0
        self.input_size = input_size
        self.feature_scale = [32, 16, 8]
        # static grid constants are built once, packed into ONE (5, L_pad) array
        (self._consts, self._feature_sizes, self._anchors_np,
         self._L, self._L_pad) = self._make_grids()

    def _make_grids(self):
        nA = self.num_anchors
        anchors_np = np.array(self.anchors, np.float32).reshape(3, nA, 2)
        gx_l, gy_l, sc_l, aw_l, ah_l, fsz = [], [], [], [], [], []
        for i, fs in enumerate(self.feature_scale):
            fh = self.input_size[0] // fs
            fw = self.input_size[1] // fs
            fsz.append((fh, fw))
            gx = np.tile(np.arange(fw, dtype=np.float32)[None, :], (fh, 1)).reshape(1, -1)
            gy = np.tile(np.arange(fh, dtype=np.float32)[:, None], (1, fw)).reshape(1, -1)
            gx_l.append(np.tile(gx, (nA, 1)))
            gy_l.append(np.tile(gy, (nA, 1)))
            sc_l.append(np.full((nA, fh * fw), float(fs), np.float32))
            aw_l.append(np.tile(anchors_np[i, :, 0:1], (1, fh * fw)))
            ah_l.append(np.tile(anchors_np[i, :, 1:2], (1, fh * fw)))
        flat = lambda ls: np.concatenate(ls, axis=1).astype(np.float32).reshape(-1)
        L = nA * sum(h * w for h, w in fsz)
        L_pad = ((L + 127) // 128) * 128          # lane-dense padding (252 -> 256)
        consts = np.zeros((5, L_pad), np.float32)
        consts[0, :L] = flat(gx_l)
        consts[1, :L] = flat(gy_l)
        consts[2, :L] = flat(sc_l)
        consts[3, :L] = flat(aw_l)
        consts[4, :L] = flat(ah_l)
        return jnp.asarray(consts), fsz, anchors_np, L, L_pad

    def forward(self, output, target):
        bs, cs = int(target.shape[0]), int(target.shape[1])
        nA, nC = self.num_anchors, self.num_classes
        N = int(output.shape[2])
        L = nA * N
        L_pad = self._L_pad
        nB = bs * cs
        assert L == self._L, "output spatial size inconsistent with the configured feature scales"

        feature_sizes = self._feature_sizes
        anchors_np = self._anchors_np

        # ---- Pallas kernel 1 (one launch): activations + pred-box decode (+ cls logits reshape) ----
        act_slab, box_slab, cls_t = decode_and_cls(output, self._consts,
                                                   nA=nA, nC=nC, bs=bs, cs=cs, L_pad=L_pad)

        # ---- neg_filter_v2 with cfg.neg_ratio == 'full' (deterministic configuration) ----
        # TODO(synk): the random negative-sample filtering branch (numeric cfg.neg_ratio) is
        # nondeterministic; the deterministic 'full' configuration is reproduced instead.
        inds = np.arange(nB)
        counts, _ = np.histogram(inds, bins=bs, range=(0, nB))
        target_np = np.asarray(target, dtype=np.float32).reshape(nB, -1)

        # ---- single blocking D2H: only conf + pred boxes (5 channels), trim pad lanes on host ----
        box_np = np.asarray(jax.device_get(box_slab))[:, :, :L]               # (5, nB, L)
        conf_np = box_np[0].reshape(nB, nA, N)
        pred_boxes_np = np.transpose(box_np[1:5].reshape(4, nB, nA, N), (1, 2, 3, 0))  # (nB,nA,N,4)

        # ---- build targets per feature map (host glue, data dependent) ----
        acc = {k: [] for k in ("iou", "obj", "noobj", "tx", "ty", "tw", "th", "tcls")}
        start = 0
        nGT = 0
        detected50 = detected75 = None
        for imap in range(3):
            fh, fw = feature_sizes[imap]
            n_i = fh * fw
            (nGT, iou_t, obj_t, noobj_t, tx_t, ty_t, tw_t, th_t, tcls_t,
             d50, d75) = build_targets_np(pred_boxes_np[:, :, start:start + n_i, :], target_np,
                                          conf_np[:, :, start:start + n_i], anchors_np[imap],
                                          nA, (fh, fw), self.input_size, self.thresh)
            if detected50 is None:
                detected50 = np.zeros(nGT, np.float32)
                detected75 = np.zeros(nGT, np.float32)
            assert d50.shape[0] == nGT, "nGT (nonzero-box count) must be identical across maps"
            detected50 += d50
            detected75 += d75
            start += n_i
            for key, arr in zip(acc.keys(),
                                (iou_t, obj_t, noobj_t, tx_t, ty_t, tw_t, th_t, tcls_t)):
                acc[key].append(arr.reshape(nB, nA, n_i))
        cat2 = lambda k: np.concatenate(acc[k], axis=2)
        iou_scores, obj_m, noobj_m = cat2("iou"), cat2("obj"), cat2("noobj")
        txa, tya, twa, tha, tclsa = (cat2(k) for k in ("tx", "ty", "tw", "th", "tcls"))

        # ---- aggregate per-image class mask / class targets (host) ----
        idx_start = 0
        cls_mask_list, tcls_list = [], []
        for i in range(len(counts)):
            if counts[i] == 0:
                cur_mask = np.zeros((nA, N), np.float32)
                cur_tcls = np.zeros((nA, N), np.float32)
            else:
                cur_mask = obj_m[idx_start:idx_start + counts[i]].sum(0)
                cur_tcls = tclsa[idx_start:idx_start + counts[i]].sum(0)
            cls_mask_list.append(cur_mask)
            tcls_list.append(cur_tcls)
            idx_start += counts[i]
        # `== 1` (not >= 1) matches the reference exactly.
        cls_mask = (np.stack(cls_mask_list) == 1).astype(np.float32)          # (bs, nA, N)
        tcls_img = np.stack(tcls_list).astype(np.float32)                     # (bs, nA, N)

        # ---- pack host-built targets into single zero-padded slabs ----
        tgt_slab = np.zeros((7, nB, L_pad), np.float32)
        tgt_slab[:, :, :L] = np.stack([txa, tya, twa, tha, obj_m, noobj_m, iou_scores],
                                      axis=0).reshape(7, nB, L)
        cm = np.zeros((bs, L_pad), np.float32)
        tc = np.zeros((bs, L_pad), np.float32)
        cm[:, :L] = cls_mask.reshape(bs, L)
        tc[:, :L] = tcls_img.reshape(bs, L)
        cls_aux = np.stack([cm.reshape(-1), tc.reshape(-1)], axis=0).astype(np.float32)

        # explicit (async) H2D of the host-built slabs
        tgt_slab_dev = jax.device_put(tgt_slab)
        cls_aux_dev = jax.device_put(cls_aux)

        # ---- Pallas kernel 2 (one fused launch): masked region losses + softmax CE + FINAL loss ----
        stats = loss_cls_call(act_slab, tgt_slab_dev, cls_t, cls_aux_dev,
                              coord_scale=self.coord_scale, obj_scale=self.obj_scale,
                              noobj_scale=self.noobj_scale, class_scale=self.class_scale)

        # metrics: recall comes from the host target-assignment; precision / cls_acc stay
        # available on-device in stats[0, 1:8] and can be fetched lazily if ever needed.
        _recall50 = float((detected50 > 0).sum()) / (nGT + 1e-16)
        _recall75 = float((detected75 > 0).sum()) / (nGT + 1e-16)

        # final scalar loss is already assembled on-device; returned without any D2H sync
        return stats[0, 0]


# ============================== main ==============================
if __name__ == "__main__":
    N_TOTAL = sum((INPUT_SIZE[0] // fs) * (INPUT_SIZE[1] // fs) for fs in FEATURE_SCALE)  # 4+16+64 = 84

    key = jax.random.PRNGKey(0)
    output = 0.5 * jax.random.normal(key, (BS * CS, NA * (5 + NC), N_TOTAL), dtype=jnp.float32)

    # deterministic targets: (bs, cs, 50*5) rows of [class_id, x, y, w, h] (normalized)
    target = np.zeros((BS, CS, 50 * 5), np.float32)
    def put_box(b, c, k, cid, bx, by, bw, bh):
        target[b, c, 5 * k:5 * k + 5] = [cid, bx, by, bw, bh]
    put_box(0, 0, 0, 0, 0.30, 0.40, 0.25, 0.30)
    put_box(0, 2, 0, 2, 0.70, 0.60, 0.12, 0.20)
    put_box(1, 1, 0, 1, 0.55, 0.25, 0.40, 0.35)
    put_box(1, 1, 1, 1, 0.20, 0.80, 0.08, 0.10)
    put_box(1, 3, 0, 3, 0.45, 0.50, 0.06, 0.07)

    module = RegionLossV2(num_classes=NC, anchors=ANCHORS, num_anchors=NA, input_size=INPUT_SIZE)
    loss = module.forward(output, jnp.asarray(target))
    loss = jax.block_until_ready(loss)
    assert np.isfinite(float(loss)), "loss is not finite"
    print("KERNEL_OK")
</pallas_src>

<mosaic_0001>
module attributes {stable_mosaic.version = 11 : i64} {
  func.func @_decode_kernel(%arg0: i32, %arg1: memref<5x8x256xf32, #tpu.memory_space<vmem>>, %arg2: memref<5x256xf32, #tpu.memory_space<vmem>>, %arg3: memref<5x8x256xf32, #tpu.memory_space<vmem>>, %arg4: memref<5x8x256xf32, #tpu.memory_space<vmem>>) attributes {dimension_semantics = [#tpu.dimension_semantics<arbitrary>], iteration_bounds = array<i64: 1>, scalar_prefetch = 0 : i64, scratch_operands = 0 : i64, tpu.core_type = #tpu.core_type<tc>, window_params = [{pipeline_mode = #tpu.pipeline_mode<synchronous>, transform_indices = @transform_0, window_bounds = array<i64: 5, 8, 256>}, {pipeline_mode = #tpu.pipeline_mode<synchronous>, transform_indices = @transform_1, window_bounds = array<i64: 5, 256>}, {pipeline_mode = #tpu.pipeline_mode<synchronous>, transform_indices = @transform_2, window_bounds = array<i64: 5, 8, 256>}, {pipeline_mode = #tpu.pipeline_mode<synchronous>, transform_indices = @transform_3, window_bounds = array<i64: 5, 8, 256>}]} {
    %c0 = arith.constant 0 : index
    %c0_0 = arith.constant 0 : index
    %c0_1 = arith.constant 0 : index
    %0 = vector.load %arg1[%c0, %c0_0, %c0_1] : memref<5x8x256xf32, #tpu.memory_space<vmem>>, vector<1x8x256xf32>
    %1 = vector.shape_cast %0 : vector<1x8x256xf32> to vector<8x256xf32>
    %c1 = arith.constant 1 : index
    %c0_2 = arith.constant 0 : index
    %c0_3 = arith.constant 0 : index
    %2 = vector.load %arg1[%c1, %c0_2, %c0_3] : memref<5x8x256xf32, #tpu.memory_space<vmem>>, vector<1x8x256xf32>
    %3 = vector.shape_cast %2 : vector<1x8x256xf32> to vector<8x256xf32>
    %c2 = arith.constant 2 : index
    %c0_4 = arith.constant 0 : index
    %c0_5 = arith.constant 0 : index
    %4 = vector.load %arg1[%c2, %c0_4, %c0_5] : memref<5x8x256xf32, #tpu.memory_space<vmem>>, vector<1x8x256xf32>
    %5 = vector.shape_cast %4 : vector<1x8x256xf32> to vector<8x256xf32>
    %c3 = arith.constant 3 : index
    %c0_6 = arith.constant 0 : index
    %c0_7 = arith.constant 0 : index
    %6 = vector.load %arg1[%c3, %c0_6, %c0_7] : memref<5x8x256xf32, #tpu.memory_space<vmem>>, vector<1x8x256xf32>
    %7 = vector.shape_cast %6 : vector<1x8x256xf32> to vector<8x256xf32>
    %c4 = arith.constant 4 : index
    %c0_8 = arith.constant 0 : index
    %c0_9 = arith.constant 0 : index
    %8 = vector.load %arg1[%c4, %c0_8, %c0_9] : memref<5x8x256xf32, #tpu.memory_space<vmem>>, vector<1x8x256xf32>
    %9 = vector.shape_cast %8 : vector<1x8x256xf32> to vector<8x256xf32>
    %cst = arith.constant 0.000000e+00 : f32
    %10 = vector.broadcast %cst : f32 to vector<8x256xf32>
    %11 = arith.subf %10, %1 : vector<8x256xf32>
    %12 = math.exp %11 : vector<8x256xf32>
    %cst_10 = arith.constant 1.000000e+00 : f32
    %13 = vector.broadcast %cst_10 : f32 to vector<8x256xf32>
    %14 = arith.addf %13, %12 : vector<8x256xf32>
    %15 = tpu.reciprocal %14 {approx = true} : vector<8x256xf32> -> vector<8x256xf32>
    %cst_11 = arith.constant 0.000000e+00 : f32
    %16 = vector.broadcast %cst_11 : f32 to vector<8x256xf32>
    %17 = arith.subf %16, %3 : vector<8x256xf32>
    %18 = math.exp %17 : vector<8x256xf32>
    %cst_12 = arith.constant 1.000000e+00 : f32
    %19 = vector.broadcast %cst_12 : f32 to vector<8x256xf32>
    %20 = arith.addf %19, %18 : vector<8x256xf32>
    %21 = tpu.reciprocal %20 {approx = true} : vector<8x256xf32> -> vector<8x256xf32>
    %cst_13 = arith.constant 0.000000e+00 : f32
    %22 = vector.broadcast %cst_13 : f32 to vector<8x256xf32>
    %23 = arith.subf %22, %9 : vector<8x256xf32>
    %24 = math.exp %23 : vector<8x256xf32>
    %cst_14 = arith.constant 1.000000e+00 : f32
    %25 = vector.broadcast %cst_14 : f32 to vector<8x256xf32>
    %26 = arith.addf %25, %24 : vector<8x256xf32>
    %cst_15 = arith.constant 1.000000e+00 : f32
    %27 = vector.broadcast %cst_15 : f32 to vector<8x256xf32>
    %28 = arith.divf %27, %26 : vector<8x256xf32>
    %c0_16 = arith.constant 0 : index
    %c0_17 = arith.constant 0 : index
    %29 = vector.load %arg2[%c0_16, %c0_17] : memref<5x256xf32, #tpu.memory_space<vmem>>, vector<1x256xf32>
    %c1_18 = arith.constant 1 : index
    %c0_19 = arith.constant 0 : index
    %30 = vector.load %arg2[%c1_18, %c0_19] : memref<5x256xf32, #tpu.memory_space<vmem>>, vector<1x256xf32>
    %c2_20 = arith.constant 2 : index
    %c0_21 = arith.constant 0 : index
    %31 = vector.load %arg2[%c2_20, %c0_21] : memref<5x256xf32, #tpu.memory_space<vmem>>, vector<1x256xf32>
    %c3_22 = arith.constant 3 : index
    %c0_23 = arith.constant 0 : index
    %32 = vector.load %arg2[%c3_22, %c0_23] : memref<5x256xf32, #tpu.memory_space<vmem>>, vector<1x256xf32>
    %c4_24 = arith.constant 4 : index
    %c0_25 = arith.constant 0 : index
    %33 = vector.load %arg2[%c4_24, %c0_25] : memref<5x256xf32, #tpu.memory_space<vmem>>, vector<1x256xf32>
    %c0_26 = arith.constant 0 : index
    %c0_27 = arith.constant 0 : index
    %c0_28 = arith.constant 0 : index
    %34 = vector.load %arg3[%c0_26, %c0_27, %c0_28] : memref<5x8x256xf32, #tpu.memory_space<vmem>>, vector<1x8x256xf32>
    %35 = vector.shape_cast %34 : vector<1x8x256xf32> to vector<8x256xf32>
    %36 = vector.shape_cast %15 : vector<8x256xf32> to vector<1x8x256xf32>
    tpu.vector_store %arg3[%c0_26, %c0_27, %c0_28], %36 {strides = array<i32>} : memref<5x8x256xf32, #tpu.memory_space<vmem>>, vector<1x8x256xf32>,
    %c1_29 = arith.constant 1 : index
    %c0_30 = arith.constant 0 : index
    %c0_31 = arith.constant 0 : index
    %37 = vector.load %arg3[%c1_29, %c0_30, %c0_31] : memref<5x8x256xf32, #tpu.memory_space<vmem>>, vector<1x8x256xf32>
    %38 = vector.shape_cast %37 : vector<1x8x256xf32> to vector<8x256xf32>
    %39 = vector.shape_cast %21 : vector<8x256xf32> to vector<1x8x256xf32>
    tpu.vector_store %arg3[%c1_29, %c0_30, %c0_31], %39 {strides = array<i32>} : memref<5x8x256xf32, #tpu.memory_space<vmem>>, vector<1x8x256xf32>,
    %c2_32 = arith.constant 2 : index
    %c0_33 = arith.constant 0 : index
    %c0_34 = arith.constant 0 : index
    %40 = vector.load %arg3[%c2_32, %c0_33, %c0_34] : memref<5x8x256xf32, #tpu.memory_space<vmem>>, vector<1x8x256xf32>
    %41 = vector.shape_cast %40 : vector<1x8x256xf32> to vector<8x256xf32>
    %42 = vector.shape_cast %5 : vector<8x256xf32> to vector<1x8x256xf32>
    tpu.vector_store %arg3[%c2_32, %c0_33, %c0_34], %42 {strides = array<i32>} : memref<5x8x256xf32, #tpu.memory_space<vmem>>, vector<1x8x256xf32>,
    %c3_35 = arith.constant 3 : index
    %c0_36 = arith.constant 0 : index
    %c0_37 = arith.constant 0 : index
    %43 = vector.load %arg3[%c3_35, %c0_36, %c0_37] : memref<5x8x256xf32, #tpu.memory_space<vmem>>, vector<1x8x256xf32>
    %44 = vector.shape_cast %43 : vector<1x8x256xf32> to vector<8x256xf32>
    %45 = vector.shape_cast %7 : vector<8x256xf32> to vector<1x8x256xf32>
    tpu.vector_store %arg3[%c3_35, %c0_36, %c0_37], %45 {strides = array<i32>} : memref<5x8x256xf32, #tpu.memory_space<vmem>>, vector<1x8x256xf32>,
    %c4_38 = arith.constant 4 : index
    %c0_39 = arith.constant 0 : index
    %c0_40 = arith.constant 0 : index
    %46 = vector.load %arg3[%c4_38, %c0_39, %c0_40] : memref<5x8x256xf32, #tpu.memory_space<vmem>>, vector<1x8x256xf32>
    %47 = vector.shape_cast %46 : vector<1x8x256xf32> to vector<8x256xf32>
    %48 = vector.shape_cast %28 : vector<8x256xf32> to vector<1x8x256xf32>
    tpu.vector_store %arg3[%c4_38, %c0_39, %c0_40], %48 {strides = array<i32>} : memref<5x8x256xf32, #tpu.memory_space<vmem>>, vector<1x8x256xf32>,
    %c0_41 = arith.constant 0 : index
    %c0_42 = arith.constant 0 : index
    %c0_43 = arith.constant 0 : index
    %49 = vector.load %arg4[%c0_41, %c0_42, %c0_43] : memref<5x8x256xf32, #tpu.memory_space<vmem>>, vector<1x8x256xf32>
    %50 = vector.shape_cast %49 : vector<1x8x256xf32> to vector<8x256xf32>
    %51 = vector.shape_cast %28 : vector<8x256xf32> to vector<1x8x256xf32>
    tpu.vector_store %arg4[%c0_41, %c0_42, %c0_43], %51 {strides = array<i32>} : memref<5x8x256xf32, #tpu.memory_space<vmem>>, vector<1x8x256xf32>,
    %52 = vector.broadcast %29 : vector<1x256xf32> to vector<8x256xf32>
    %53 = arith.addf %15, %52 : vector<8x256xf32>
    %54 = vector.broadcast %31 : vector<1x256xf32> to vector<8x256xf32>
    %55 = arith.mulf %53, %54 : vector<8x256xf32>
    %c1_44 = arith.constant 1 : index
    %c0_45 = arith.constant 0 : index
    %c0_46 = arith.constant 0 : index
    %56 = vector.load %arg4[%c1_44, %c0_45, %c0_46] : memref<5x8x256xf32, #tpu.memory_space<vmem>>, vector<1x8x256xf32>
    %57 = vector.shape_cast %56 : vector<1x8x256xf32> to vector<8x256xf32>
    %58 = vector.shape_cast %55 : vector<8x256xf32> to vector<1x8x256xf32>
    tpu.vector_store %arg4[%c1_44, %c0_45, %c0_46], %58 {strides = array<i32>} : memref<5x8x256xf32, #tpu.memory_space<vmem>>, vector<1x8x256xf32>,
    %59 = vector.broadcast %30 : vector<1x256xf32> to vector<8x256xf32>
    %60 = arith.addf %21, %59 : vector<8x256xf32>
    %61 = vector.broadcast %31 : vector<1x256xf32> to vector<8x256xf32>
    %62 = arith.mulf %60, %61 : vector<8x256xf32>
    %c2_47 = arith.constant 2 : index
    %c0_48 = arith.constant 0 : index
    %c0_49 = arith.constant 0 : index
    %63 = vector.load %arg4[%c2_47, %c0_48, %c0_49] : memref<5x8x256xf32, #tpu.memory_space<vmem>>, vector<1x8x256xf32>
    %64 = vector.shape_cast %63 : vector<1x8x256xf32> to vector<8x256xf32>
    %65 = vector.shape_cast %62 : vector<8x256xf32> to vector<1x8x256xf32>
    tpu.vector_store %arg4[%c2_47, %c0_48, %c0_49], %65 {strides = array<i32>} : memref<5x8x256xf32, #tpu.memory_space<vmem>>, vector<1x8x256xf32>,
    %66 = math.exp %5 : vector<8x256xf32>
    %67 = vector.broadcast %32 : vector<1x256xf32> to vector<8x256xf32>
    %68 = arith.mulf %66, %67 : vector<8x256xf32>
    %c3_50 = arith.constant 3 : index
    %c0_51 = arith.constant 0 : index
    %c0_52 = arith.constant 0 : index
    %69 = vector.load %arg4[%c3_50, %c0_51, %c0_52] : memref<5x8x256xf32, #tpu.memory_space<vmem>>, vector<1x8x256xf32>
    %70 = vector.shape_cast %69 : vector<1x8x256xf32> to vector<8x256xf32>
    %71 = vector.shape_cast %68 : vector<8x256xf32> to vector<1x8x256xf32>
    tpu.vector_store %arg4[%c3_50, %c0_51, %c0_52], %71 {strides = array<i32>} : memref<5x8x256xf32, #tpu.memory_space<vmem>>, vector<1x8x256xf32>,
    %72 = math.exp %7 : vector<8x256xf32>
    %73 = vector.broadcast %33 : vector<1x256xf32> to vector<8x256xf32>
    %74 = arith.mulf %72, %73 : vector<8x256xf32>
    %c4_53 = arith.constant 4 : index
    %c0_54 = arith.constant 0 : index
    %c0_55 = arith.constant 0 : index
    %75 = vector.load %arg4[%c4_53, %c0_54, %c0_55] : memref<5x8x256xf32, #tpu.memory_space<vmem>>, vector<1x8x256xf32>
    %76 = vector.shape_cast %75 : vector<1x8x256xf32> to vector<8x256xf32>
    %77 = vector.shape_cast %74 : vector<8x256xf32> to vector<1x8x256xf32>
    tpu.vector_store %arg4[%c4_53, %c0_54, %c0_55], %77 {strides = array<i32>} : memref<5x8x256xf32, #tpu.memory_space<vmem>>, vector<1x8x256xf32>,
    return
  }
  func.func @transform_0(%arg0: i32) -> (i32, i32, i32) {
    %c0_i32 = arith.constant 0 : i32
    %c0_i32_0 = arith.constant 0 : i32
    %c0_i32_1 = arith.constant 0 : i32
    %c0_i32_2 = arith.constant 0 : i32
    return %c0_i32, %c0_i32_0, %c0_i32_1 : i32, i32, i32
  }
  func.func @transform_1(%arg0: i32) -> (i32, i32) {
    %c0_i32 = arith.constant 0 : i32
    %c0_i32_0 = arith.constant 0 : i32
    %c0_i32_1 = arith.constant 0 : i32
    return %c0_i32, %c0_i32_0 : i32, i32
  }
  func.func @transform_2(%arg0: i32) -> (i32, i32, i32) {
    %c0_i32 = arith.constant 0 : i32
    %c0_i32_0 = arith.constant 0 : i32
    %c0_i32_1 = arith.constant 0 : i32
    %c0_i32_2 = arith.constant 0 : i32
    return %c0_i32, %c0_i32_0, %c0_i32_1 : i32, i32, i32
  }
  func.func @transform_3(%arg0: i32) -> (i32, i32, i32) {
    %c0_i32 = arith.constant 0 : i32
    %c0_i32_0 = arith.constant 0 : i32
    %c0_i32_1 = arith.constant 0 : i32
    %c0_i32_2 = arith.constant 0 : i32
    return %c0_i32, %c0_i32_0, %c0_i32_1 : i32, i32, i32
  }
}

</mosaic_0001>

<llo_original>
// kernel: squeeze.1
$region0: #{squeeze.1}
  %s0 = inlined_call_operand.vmem [shape: f32[8,3,1,84], index: 0, kind: input, shape index: {}]
  %s1 = inlined_call_operand.vmem [shape: f32[2,4,252], index: 1, kind: output, shape index: {}]
  $region1: #{squeeze.1} parent=0
    #allocation0 [shape = 'u8[16384]{0}', space=vmem, size = 0x4000, scoped, tag = 'scoped mem for output reshape']
    #allocation1 [shape = 'u8[32768]{0}', space=vmem, size = 0x8000, scoped, tag = 'scoped mem for input reshape']
    %s3 = ssub.s32 16, 1
    %s4 = scalar_lea.vmem %s0, 28
    %v5 = vld [vmem:[%s4] sm:%s3]
    %s6 = scalar_lea.vmem [#allocation1], 56
    %7 = vst [vmem:[%s6] sm:%s3] %v5
    %s8 = scalar_lea.vmem %s0, 24
    %v9 = vld [vmem:[%s8] sm:%s3]
    %s10 = scalar_lea.vmem [#allocation1], 48
    %11 = vst [vmem:[%s10] sm:%s3] %v9
    %s12 = scalar_lea.vmem %s0, 20
    %v13 = vld [vmem:[%s12] sm:%s3]
    %s14 = scalar_lea.vmem [#allocation1], 40
    %15 = vst [vmem:[%s14] sm:%s3] %v13
    %s16 = scalar_lea.vmem %s0, 16
    %v17 = vld [vmem:[%s16] sm:%s3]
    %s18 = scalar_lea.vmem [#allocation1], 32
    %19 = vst [vmem:[%s18] sm:%s3] %v17
    %s20 = scalar_lea.vmem %s0, 12
    %v21 = vld [vmem:[%s20] sm:%s3]
    %s22 = scalar_lea.vmem [#allocation1], 24
    %23 = vst [vmem:[%s22] sm:%s3] %v21
    %s24 = scalar_lea.vmem %s0, 8
    %v25 = vld [vmem:[%s24] sm:%s3]
    %s26 = scalar_lea.vmem [#allocation1], 16
    %27 = vst [vmem:[%s26] sm:%s3] %v25
    %s28 = scalar_lea.vmem %s0, 4
    %v29 = vld [vmem:[%s28] sm:%s3]
    %s30 = scalar_lea.vmem [#allocation1], 8
    %31 = vst [vmem:[%s30] sm:%s3] %v29
    %v32 = vld [vmem:[%s0] sm:%s3]
    %33 = vst [vmem:[#allocation1] sm:%s3] %v32
    %v34 = vld [vmem:[#allocation1] ss:$8 sm:$0xf]
    %v35 = vld [vmem:[#allocation1] ss:$8 sm:$0xf0]
    %vm36 = vcmask 1047556
    %v37 = vsel %vm36, %v35, %v34
    %vm38 = vcmask 687104
    %39 = vst.msk [vmem:[#allocation0] sm:$0xf] %vm38, %v37
    %s40 = scalar_lea.vmem [#allocation0], 12
    %41 = vst.msk [vmem:[%s40] sm:$0xf0] %vm38, %v37
    %s42 = scalar_lea.vmem [#allocation1], 1
    %v43 = vld [vmem:[%s42] ss:$8 sm:$0xf]
    %s44 = scalar_lea.vmem [#allocation1], 1
    %v45 = vld [vmem:[%s44] ss:$8 sm:$0xf0]
    %vm46 = vcmask 1047556
    %v47 = vsel %vm46, %v45, %v43
    %s48 = scalar_lea.vmem [#allocation1], 1
    %v49 = vld [vmem:[%s48] ss:$8 sm:$0xf]
    %s50 = scalar_lea.vmem [#allocation1], 1
    %v51 = vld [vmem:[%s50] ss:$8 sm:$0xf0]
    %vm52 = vcmask 1047556
    %v53 = vsel %vm52, %v51, %v49
    %vm54 = vcmask 359424
    %v55 = vsel %vm54, %v53, %v47
    %56 = vrot.lane.b32.xlu0 %v55, 84
    %v57 = vpop.permute.xlu0 %56
    %vm58 = vcmask 326656
    %s59 = scalar_lea.vmem [#allocation0], 8
    %60 = vst.msk [vmem:[%s59] sm:$0xf] %vm58, %v57
    %s61 = scalar_lea.vmem [#allocation0], 20
    %62 = vst.msk [vmem:[%s61] sm:$0xf0] %vm58, %v57
    %vm63 = vcmask 1048224
    %64 = vst.msk [vmem:[#allocation0] sm:$0xf] %vm63, %v57
    %s65 = scalar_lea.vmem [#allocation0], 12
    %66 = vst.msk [vmem:[%s65] sm:$0xf0] %vm63, %v57
    %s67 = scalar_lea.vmem [#allocation1], 2
    %v68 = vld [vmem:[%s67] ss:$8 sm:$0xf]
    %s69 = scalar_lea.vmem [#allocation1], 2
    %v70 = vld [vmem:[%s69] ss:$8 sm:$0xf0]
    %vm71 = vcmask 1047556
    %v72 = vsel %vm71, %v70, %v68
    %73 = vrot.lane.b32.xlu0 %v72, 40
    %v74 = vpop.permute.xlu0 %73
    %vm75 = vcmask 1015104
    %s76 = scalar_lea.vmem [#allocation0], 8
    %77 = vst.msk [vmem:[%s76] sm:$0xf] %vm75, %v74
    %s78 = scalar_lea.vmem [#allocation0], 20
    %79 = vst.msk [vmem:[%s78] sm:$0xf0] %vm75, %v74
    %s81 = ssub.s32 16, 1
    %v82 = vld [vmem:[#allocation0] sm:%s81]
    %s84 = ssub.s32 16, 1
    %85 = vst [vmem:[%s1] sm:%s84] %v82
    %s86 = scalar_lea.vmem [#allocation0], 8
    %v87 = vld [vmem:[%s86] sm:%s81]
    %s89 = ssub.s32 16, 1
    %s90 = scalar_lea.vmem %s1, 4
    %91 = vst [vmem:[%s90] sm:%s89] %v87
    %s92 = scalar_lea.vmem [#allocation0], 16
    %v93 = vld [vmem:[%s92] sm:%s81]
    %s95 = ssub.s32 16, 1
    %s96 = scalar_lea.vmem %s1, 8
    %97 = vst [vmem:[%s96] sm:%s95] %v93
    %s98 = scalar_lea.vmem [#allocation0], 24
    %v99 = vld [vmem:[%s98] sm:%s81]
    %s101 = ssub.s32 16, 1
    %s102 = scalar_lea.vmem %s1, 12
    %103 = vst [vmem:[%s102] sm:%s101] %v99

// kernel: decode_and_cls.1
$region0: #{decode_and_cls.1}
  #allocation0 [shape = 'u32[]', space=smem, size = 0x4, offset = 0x4, fixed_abs, tag = 'smem constant byte address 0x4 - core index']
  #allocation1 [shape = 'u32[72,128]{1,0:T(1,128)}', space=vmem, size = 0x9000, scoped, tag = 'internal scratch']
  %s0 = inlined_call_operand.vmem [shape: f32[5,8,256], index: 0, kind: input, shape index: {}]
  %s1 = inlined_call_operand.vmem [shape: f32[5,256], index: 1, kind: input, shape index: {}]
  %s2 = inlined_call_operand.hbm [shape: f32[5,8,256], index: 2, kind: output, shape index: {0}]
  %s3 = inlined_call_operand.hbm [shape: f32[5,8,256], index: 3, kind: output, shape index: {1}]
  %4 = xla_tuple %s2, %s3
  %s5 = sld [smem:[#allocation0]]
  $region26: #{decode_and_cls.1} parent=0
    _
  %s7 = ssub.s32 1, %s5
  %s8 = scalar_select 0, %s7, %s5
  $region1: #{decode_and_cls.1} parent=0
    #allocation2 [shape = 'u8[40960]{0}', space=vmem, size = 0xa000, scoped, tag = 'output window, operand 0, single buffered']
    #allocation3 [shape = 's32[1]{0}', space=sflag, size = 0x4, scoped, tag = 'scoped memory for decode_and_cls.1']
    #allocation4 [shape = 'u8[40960]{0}', space=vmem, size = 0xa000, scoped, tag = 'output window, operand 1, single buffered']
    #allocation5 [shape = 's32[1]{0}', space=sflag, size = 0x4, scoped, tag = 'scoped memory for decode_and_cls.1']
    %9 = vsyncpa [#allocation3], 0
    %10 = vsyncpa [#allocation5], 0
    // Predicated region
    $region2: #{decode_and_cls.1} parent=1 // pred_check
      _
    $region3: #{decode_and_cls.1} parent=1 // pred_check_branch
      %12 = sbr.rel (0) target = $region5
    $region4: #{decode_and_cls.1} parent=1 // pred_region
      _
    $region5: #{decode_and_cls.1} parent=1 // pred_fallthru
      _
    // Predicated region
    $region6: #{decode_and_cls.1} parent=1 // pred_check
      _
    $region7: #{decode_and_cls.1} parent=1 // pred_check_branch
      %14 = sbr.rel (0) target = $region9
    $region8: #{decode_and_cls.1} parent=1 // pred_region
      _
    $region9: #{decode_and_cls.1} parent=1 // pred_fallthru
      _
    %v15 = vld [vmem:[%s0] sm:$0xff]
    %v16 = vld [vmem:[%s0 + $0x8] sm:$0xff]
    %s17 = scalar_lea.vmem %s0, 16
    %v18 = vld [vmem:[%s17] sm:$0xff]
    %v19 = vld [vmem:[%s17 + $0x8] sm:$0xff]
    %s20 = scalar_lea.vmem %s0, 32
    %v21 = vld [vmem:[%s20] sm:$0xff]
    %v22 = vld [vmem:[%s20 + $0x8] sm:$0xff]
    %s23 = scalar_lea.vmem %s0, 48
    %v24 = vld [vmem:[%s23] sm:$0xff]
    %v25 = vld [vmem:[%s23 + $0x8] sm:$0xff]
    %s26 = scalar_lea.vmem %s0, 64
    %v27 = vld [vmem:[%s26] sm:$0xff]
    %v28 = vld [vmem:[%s26 + $0x8] sm:$0xff]
    %v29 = vsub.f32 0.0, %v15
    %v30 = vsub.f32 0.0, %v16
    %v31 = vmul.f32 %v29, 1.442695
    %v32 = vpow.pop %v31
    %v33 = vmul.f32 %v30, 1.442695
    %v34 = vpow.pop %v33
    %v35 = vadd.f32 %v32, 1.0
    %v36 = vadd.f32 %v34, 1.0
    %v37 = vrcp.pop %v35
    %v38 = vrcp.pop %v36
    %v39 = vsub.f32 0.0, %v18
    %v40 = vsub.f32 0.0, %v19
    %v41 = vmul.f32 %v39, 1.442695
    %v42 = vpow.pop %v41
    %v43 = vmul.f32 %v40, 1.442695
    %v44 = vpow.pop %v43
    %v45 = vadd.f32 %v42, 1.0
    %v46 = vadd.f32 %v44, 1.0
    %v47 = vrcp.pop %v45
    %v48 = vrcp.pop %v46
    %v49 = vsub.f32 0.0, %v27
    %v50 = vsub.f32 0.0, %v28
    %v51 = vmul.f32 %v49, 1.442695
    %v52 = vpow.pop %v51
    %v53 = vmul.f32 %v50, 1.442695
    %v54 = vpow.pop %v53
    %v55 = vadd.f32 %v52, 1.0
    %v56 = vadd.f32 %v54, 1.0
    %v57 = vrcp.pop %v55
    %v58 = vmul.f32 %v55, %v57
    %v59 = vsub.f32 1.0, %v58
    %v60 = vmul.f32 %v57, %v59
    %v61 = vadd.f32 %v57, %v60
    %vm62 = vweird.f32 %v55
    %vm63 = vweird.f32 %v57
    %vm64 = vmor %vm62, %vm63
    %v65 = vsel %vm64, %v57, %v61
    %v66 = vand.u32 2147483647, %v55
    %vm67 = vcmp.eq.f32.partialorder %v66, 8.507059e+37
    %v68 = vand.u32 %v55, 2147483648
    %v69 = vor.u32 1.1754944e-38, %v68
    %v70 = vsel %vm67, %v69, %v65
    %v71 = vmul.f32 1.0, %v70
    %v72 = vrcp.pop %v56
    %v73 = vmul.f32 %v56, %v72
    %v74 = vsub.f32 1.0, %v73
    %v75 = vmul.f32 %v72, %v74
    %v76 = vadd.f32 %v72, %v75
    %vm77 = vweird.f32 %v56
    %vm78 = vweird.f32 %v72
    %vm79 = vmor %vm77, %vm78
    %v80 = vsel %vm79, %v72, %v76
    %v81 = vand.u32 2147483647, %v56
    %vm82 = vcmp.eq.f32.partialorder %v81, 8.507059e+37
    %v83 = vand.u32 %v56, 2147483648
    %v84 = vor.u32 1.1754944e-38, %v83
    %v85 = vsel %vm82, %v84, %v80
    %v86 = vmul.f32 1.0, %v85
    %v87 = vld [vmem:[%s1] ss:$8 sm:$0x3]
    %s88 = scalar_lea.vmem %s1, 1
    %v89 = vld [vmem:[%s88] ss:$8 sm:$0x3]
    %s90 = scalar_lea.vmem %s1, 2
    %v91 = vld [vmem:[%s90] ss:$8 sm:$0x3]
    %s92 = scalar_lea.vmem %s1, 3
    %v93 = vld [vmem:[%s92] ss:$8 sm:$0x3]
    %s94 = scalar_lea.vmem %s1, 4
    %v95 = vld [vmem:[%s94] ss:$8 sm:$0x3]
    %96 = vst [vmem:[#allocation2] sm:$0xff] %v37
    %97 = vst [vmem:[#allocation2 + $0x8] sm:$0xff] %v38
    %s98 = scalar_lea.vmem [#allocation2], 16
    %99 = vst [vmem:[%s98] sm:$0xff] %v47
    %100 = vst [vmem:[%s98 + $0x8] sm:$0xff] %v48
    %s101 = scalar_lea.vmem [#allocation2], 32
    %102 = vst [vmem:[%s101] sm:$0xff] %v21
    %103 = vst [vmem:[%s101 + $0x8] sm:$0xff] %v22
    %s104 = scalar_lea.vmem [#allocation2], 48
    %105 = vst [vmem:[%s104] sm:$0xff] %v24
    %106 = vst [vmem:[%s104 + $0x8] sm:$0xff] %v25
    %s107 = scalar_lea.vmem [#allocation2], 64
    %108 = vst [vmem:[%s107] sm:$0xff] %v71
    %109 = vst [vmem:[%s107 + $0x8] sm:$0xff] %v86
    %110 = vst [vmem:[#allocation4] sm:$0xff] %v71
    %111 = vst [vmem:[#allocation4 + $0x8] sm:$0xff] %v86
    %v113 = vperm.slane %v87, 0
    %v114 = vperm.slane %v87, 1
    %v117 = vadd.f32 %v37, %v113
    %v118 = vadd.f32 %v38, %v114
    %v120 = vperm.slane %v91, 0
    %v121 = vperm.slane %v91, 1
    %v124 = vmul.f32 %v117, %v120
    %v125 = vmul.f32 %v118, %v121
    %s126 = scalar_lea.vmem [#allocation4], 16
    %127 = vst [vmem:[%s126] sm:$0xff] %v124
    %128 = vst [vmem:[%s126 + $0x8] sm:$0xff] %v125
    %v130 = vperm.slane %v89, 0
    %v131 = vperm.slane %v89, 1
    %v134 = vadd.f32 %v47, %v130
    %v135 = vadd.f32 %v48, %v131
    %v136 = vmul.f32 %v134, %v120
    %v137 = vmul.f32 %v135, %v121
    %s138 = scalar_lea.vmem [#allocation4], 32
    %139 = vst [vmem:[%s138] sm:$0xff] %v136
    %140 = vst [vmem:[%s138 + $0x8] sm:$0xff] %v137
    %v141 = vmul.f32 %v21, 1.442695
    %v142 = vpow.pop %v141
    %v143 = vmul.f32 %v22, 1.442695
    %v144 = vpow.pop %v143
    %v146 = vperm.slane %v93, 0
    %v147 = vperm.slane %v93, 1
    %v150 = vmul.f32 %v142, %v146
    %v151 = vmul.f32 %v144, %v147
    %s152 = scalar_lea.vmem [#allocation4], 48
    %153 = vst [vmem:[%s152] sm:$0xff] %v150
    %154 = vst [vmem:[%s152 + $0x8] sm:$0xff] %v151
    %v155 = vmul.f32 %v24, 1.442695
    %v156 = vpow.pop %v155
    %v157 = vmul.f32 %v25, 1.442695
    %v158 = vpow.pop %v157
    %v160 = vperm.slane %v95, 0
    %v161 = vperm.slane %v95, 1
    %v164 = vmul.f32 %v156, %v160
    %v165 = vmul.f32 %v158, %v161
    %s166 = scalar_lea.vmem [#allocation4], 64
    %167 = vst [vmem:[%s166] sm:$0xff] %v164
    %168 = vst [vmem:[%s166 + $0x8] sm:$0xff] %v165
    // Predicated region
    $region10: #{decode_and_cls.1} parent=1 // pred_check
      _
    $region11: #{decode_and_cls.1} parent=1 // pred_check_branch
      %170 = sbr.rel (0) target = $region13
    $region12: #{decode_and_cls.1} parent=1 // pred_region
      %172 = vsyncadd [#allocation3], 0
      %s173 = sshll.u32 [#allocation2], 4
      %s174 = int_to_ptr.vmem [resolvable:$true] %s173
      %s175 = sshll.u32 %s2, 4
      %s176 = int_to_ptr.hbm [resolvable:$true] %s175
      %181 = dma.vmem_to_hbm [thread:$0]  %s174, 1280, %s176, [#allocation3], 256, 256, 16
    $region13: #{decode_and_cls.1} parent=1 // pred_fallthru
      _
    // Predicated region
    $region14: #{decode_and_cls.1} parent=1 // pred_check
      _
    $region15: #{decode_and_cls.1} parent=1 // pred_check_branch
      %183 = sbr.rel (0) target = $region17
    $region16: #{decode_and_cls.1} parent=1 // pred_region
      %185 = vsyncadd [#allocation5], 0
      %s186 = sshll.u32 [#allocation4], 4
      %s187 = int_to_ptr.vmem [resolvable:$true] %s186
      %s188 = sshll.u32 %s3, 4
      %s189 = int_to_ptr.hbm [resolvable:$true] %s188
      %194 = dma.vmem_to_hbm [thread:$0]  %s187, 1280, %s189, [#allocation5], 256, 256, 16
    $region17: #{decode_and_cls.1} parent=1 // pred_fallthru
      _
    // Predicated region
    $region18: #{decode_and_cls.1} parent=1 // pred_check
      _
    $region19: #{decode_and_cls.1} parent=1 // pred_check_branch
      %196 = sbr.rel (0) target = $region21
    $region20: #{decode_and_cls.1} parent=1 // pred_region
      %198 = dma.done [#allocation3], 1280
    $region21: #{decode_and_cls.1} parent=1 // pred_fallthru
      _
    // Predicated region
    $region22: #{decode_and_cls.1} parent=1 // pred_check
      _
    $region23: #{decode_and_cls.1} parent=1 // pred_check_branch
      %200 = sbr.rel (0) target = $region25
    $region24: #{decode_and_cls.1} parent=1 // pred_region
      %202 = dma.done [#allocation5], 1280
    $region25: #{decode_and_cls.1} parent=1 // pred_fallthru
      _
    %203 = vsyncpa [#allocation3], 1
    %204 = vsyncpa [#allocation5], 1

</llo_original>
